<compile_context>
chip_gen: v7x
topology: tpu7x:2x2x1
jax: 0.10.0
libtpu: 0.0.40
codegen_flags: <defaults>
</compile_context>

<pallas_src>
import functools

import jax
import jax.numpy as jnp
from jax import lax
from jax.experimental import pallas as pl
from jax.experimental.pallas import tpu as pltpu

_LANE = 128
_SUBLANE = 8


def _round_up(x: int, m: int) -> int:
    return ((x + m - 1) // m) * m


# ---------------------------------------------------------------------------
# Kernel
# ---------------------------------------------------------------------------
def _value_mlp_kernel(obs_ref, w1_ref, b1_ref, w2_ref, b2_ref, w3t_ref, b3_ref,
                      out_ref):
    """Fused 3-layer MLP: Linear->ReLU->Linear->ReLU->Linear (no output act).

    obs_ref : [bm, S]   f32   (cast to bf16 here; avoids a wrapper pre-pass)
    w1_ref  : [S,  Hp]  bf16   b1_ref: [1, Hp] f32
    w2_ref  : [Hp, Hp]  bf16   b2_ref: [1, Hp] f32
    w3t_ref : [1,  Hp]  bf16   b3_ref: [1, 1 ] f32
    out_ref : [1, 1, bm] f32   (lane-dense along batch)
    """
    obs = obs_ref[...].astype(jnp.bfloat16)

    # Layer 1: bf16 MXU matmul, f32 accumulate; bias + ReLU in f32 (VPU).
    h = jnp.dot(obs, w1_ref[...], preferred_element_type=jnp.float32)
    h = jnp.maximum(h + b1_ref[...], 0.0)

    # Layer 2.
    h = jnp.dot(h.astype(jnp.bfloat16), w2_ref[...],
                preferred_element_type=jnp.float32)
    h = jnp.maximum(h + b2_ref[...], 0.0)

    # Output layer, lane-dense along batch:
    #   [1, Hp] contracted with [bm, Hp] on Hp  ->  [1, bm]
    o = lax.dot_general(w3t_ref[...], h.astype(jnp.bfloat16),
                        dimension_numbers=(((1,), (1,)), ((), ())),
                        preferred_element_type=jnp.float32)
    out_ref[...] = (o + b3_ref[...]).reshape(out_ref.shape)


# ---------------------------------------------------------------------------
# Parameter preparation (run ONCE, outside the per-step forward)
# ---------------------------------------------------------------------------
def prepare_params(params):
    """Pad + cast weights/biases once so the forward emits no per-call pad/astype."""
    w1, b1 = params["w1"], params["b1"]
    w2, b2 = params["w2"], params["b2"]
    w3, b3 = params["w3"], params["b3"]
    H = w1.shape[1]

    # Leave small hidden dims alone (don't over-pad); pad larger ones to the
    # 256-wide MXU of v6e/v7x.  Zero padding is exact: padded hidden units see
    # zero weights + zero bias -> relu(0)=0 and contribute nothing downstream.
    Hp = H if H <= _LANE else _round_up(H, 2 * _LANE)
    dH = Hp - H

    def pad_last(x, d):
        return x if d == 0 else jnp.pad(x, [(0, 0)] * (x.ndim - 1) + [(0, d)])

    def pad_row(x, d):
        return x if d == 0 else jnp.pad(x, ((0, d), (0, 0)))

    return {
        "w1": pad_last(w1, dH).astype(jnp.bfloat16),              # [S,  Hp]
        "b1": pad_last(b1, dH).astype(jnp.float32),               # [1,  Hp]
        "w2": pad_last(pad_row(w2, dH), dH).astype(jnp.bfloat16),  # [Hp, Hp]
        "b2": pad_last(b2, dH).astype(jnp.float32),               # [1,  Hp]
        "w3t": pad_last(w3.T, dH).astype(jnp.bfloat16),           # [1,  Hp]
        "b3": b3.astype(jnp.float32),                             # [1,  1 ]
    }


# ---------------------------------------------------------------------------
# Wrapper
# ---------------------------------------------------------------------------
def _choose_bm(batch: int, target: int) -> int:
    """Sublane-aligned batch tile; prefer >=2 grid steps (v7x megacore)."""
    if batch <= _SUBLANE:
        return _SUBLANE
    # round_up(ceil(batch/2), 8) <= batch for all batch >= 8, so the block
    # never exceeds the array.
    return max(_SUBLANE, min(target, _round_up(pl.cdiv(batch, 2), _SUBLANE)))


@functools.partial(jax.jit, static_argnames=("block_batch",))
def value_function_forward(state, prepared, *, block_batch: int = 1024):
    """ValueFunction.forward(state) via a single fused pallas_call.

    state   : [B, state_dim] float32
    prepared: output of prepare_params()
    returns : [B] float32    (squeeze_output=True)
    """
    w1, b1 = prepared["w1"], prepared["b1"]
    w2, b2 = prepared["w2"], prepared["b2"]
    w3t, b3 = prepared["w3t"], prepared["b3"]

    B, S = state.shape

    # No batch cast/pad pre-pass.  Only a tiny fix-up when B < 8 (a block must
    # not be larger than the array along the sublane dim).
    if B < _SUBLANE:
        state = jnp.pad(state, ((0, _SUBLANE - B), (0, 0)))
    B_eff = max(B, _SUBLANE)

    bm = _choose_bm(B_eff, block_batch)
    grid_b = pl.cdiv(B_eff, bm)   # ragged last block: OOB rows are garbage, sliced off

    def const(shape):
        # Constant index_map -> weight/bias stays VMEM-resident across the grid
        # (no per-step re-DMA).  For very large hidden dims one could add
        # pipeline_mode=pl.Buffered(1) to skip double-buffering the invariant
        # blocks; at typical IQL sizes (Hp<=1024) the VMEM cost is negligible.
        return pl.BlockSpec(shape, lambda i: tuple(0 for _ in shape))

    fwd = pl.pallas_call(
        _value_mlp_kernel,
        out_shape=jax.ShapeDtypeStruct((grid_b, 1, bm), jnp.float32),
        grid_spec=pltpu.PrefetchScalarGridSpec(
            num_scalar_prefetch=0,
            grid=(grid_b,),
            in_specs=[
                pl.BlockSpec((bm, S), lambda i: (i, 0)),
                const(w1.shape), const(b1.shape),
                const(w2.shape), const(b2.shape),
                const(w3t.shape), const(b3.shape),
            ],
            out_specs=pl.BlockSpec((1, 1, bm), lambda i: (i, 0, 0)),
        ),
        compiler_params=pltpu.CompilerParams(
            dimension_semantics=("parallel",)),
    )
    out = fwd(state, w1, b1, w2, b2, w3t, b3)
    # Lane-dense [grid_b, 1, bm] -> flat (free bitcast) -> real batch rows.
    return out.reshape(-1)[:B]


# ---------------------------------------------------------------------------
# Params + references
# ---------------------------------------------------------------------------
def init_params(key, state_dim, hidden_dim):
    """Deterministic synthetic init (uniform, torch-Linear fan-in scaling)."""
    ks = jax.random.split(key, 6)

    def lin(kw, kb, fan_in, fan_out):
        bound = 1.0 / jnp.sqrt(jnp.float32(fan_in))
        w = jax.random.uniform(kw, (fan_in, fan_out), jnp.float32, -bound, bound)
        b = jax.random.uniform(kb, (1, fan_out), jnp.float32, -bound, bound)
        return w, b

    w1, b1 = lin(ks[0], ks[1], state_dim, hidden_dim)
    w2, b2 = lin(ks[2], ks[3], hidden_dim, hidden_dim)
    w3, b3 = lin(ks[4], ks[5], hidden_dim, 1)
    return {"w1": w1, "b1": b1, "w2": w2, "b2": b2, "w3": w3, "b3": b3}


def _reference_forward_bf16(state, p):
    """Pure-JAX reference with the same bf16-in / f32-accumulate recipe."""
    bf, f32 = jnp.bfloat16, jnp.float32
    h = jnp.dot(state.astype(bf), p["w1"].astype(bf),
                preferred_element_type=f32) + p["b1"]
    h = jnp.maximum(h, 0.0)
    h = jnp.dot(h.astype(bf), p["w2"].astype(bf),
                preferred_element_type=f32) + p["b2"]
    h = jnp.maximum(h, 0.0)
    o = jnp.dot(h.astype(bf), p["w3"].astype(bf),
                preferred_element_type=f32) + p["b3"]
    return o[:, 0]                                    # squeeze_output=True


def _reference_forward_f32(state, p):
    # TODO(synk): kernel quantizes activations to bf16 between layers, so f32
    # parity is only to ~1e-2 relative error (flagged in the review).
    h = jnp.maximum(state @ p["w1"] + p["b1"], 0.0)
    h = jnp.maximum(h @ p["w2"] + p["b2"], 0.0)
    return (h @ p["w3"] + p["b3"])[:, 0]


# ---------------------------------------------------------------------------
# Smoke test
# ---------------------------------------------------------------------------
def _check_case(key, batch, state_dim, hidden_dim):
    k_obs, k_params = jax.random.split(key)
    state = jax.random.normal(k_obs, (batch, state_dim), dtype=jnp.float32)
    params = init_params(k_params, state_dim, hidden_dim)
    prepared = prepare_params(params)

    out = jax.block_until_ready(value_function_forward(state, prepared))

    ref_bf16 = _reference_forward_bf16(state, params)
    ref_f32 = _reference_forward_f32(state, params)

    assert out.shape == (batch,), f"bad shape {out.shape}"
    assert jnp.allclose(out, ref_bf16, atol=2e-3, rtol=2e-3), \
        f"mismatch vs bf16-matched reference (B={batch}, H={hidden_dim})"
    assert jnp.allclose(out, ref_f32, atol=5e-2, rtol=5e-2), \
        f"mismatch vs f32 reference (B={batch}, H={hidden_dim})"


if __name__ == "__main__":
    key = jax.random.PRNGKey(0)
    k1, k2 = jax.random.split(key)

    # Small shapes consistent with the module.
    _check_case(k1, batch=8, state_dim=16, hidden_dim=32)
    # Module-default hidden_dim=256, ragged batch (exercises cdiv grid + 2 steps).
    _check_case(k2, batch=50, state_dim=17, hidden_dim=256)

    print("KERNEL_OK")
</pallas_src>

<mosaic_0001>
module attributes {stable_mosaic.version = 11 : i64} {
  func.func @_value_mlp_kernel(%arg0: i32, %arg1: memref<8x16xf32, #tpu.memory_space<vmem>>, %arg2: memref<16x32xbf16, #tpu.memory_space<vmem>>, %arg3: memref<1x32xf32, #tpu.memory_space<vmem>>, %arg4: memref<32x32xbf16, #tpu.memory_space<vmem>>, %arg5: memref<1x32xf32, #tpu.memory_space<vmem>>, %arg6: memref<1x32xbf16, #tpu.memory_space<vmem>>, %arg7: memref<1x1xf32, #tpu.memory_space<vmem>>, %arg8: memref<1x1x8xf32, #tpu.memory_space<vmem>>) attributes {dimension_semantics = [#tpu.dimension_semantics<parallel>], iteration_bounds = array<i64: 1>, scalar_prefetch = 0 : i64, scratch_operands = 0 : i64, tpu.core_type = #tpu.core_type<tc>, window_params = [{transform_indices = @transform_0, window_bounds = array<i64: 8, 16>}, {pipeline_mode = #tpu.pipeline_mode<synchronous>, transform_indices = @transform_1, window_bounds = array<i64: 16, 32>}, {pipeline_mode = #tpu.pipeline_mode<synchronous>, transform_indices = @transform_2, window_bounds = array<i64: 1, 32>}, {pipeline_mode = #tpu.pipeline_mode<synchronous>, transform_indices = @transform_3, window_bounds = array<i64: 32, 32>}, {pipeline_mode = #tpu.pipeline_mode<synchronous>, transform_indices = @transform_4, window_bounds = array<i64: 1, 32>}, {pipeline_mode = #tpu.pipeline_mode<synchronous>, transform_indices = @transform_5, window_bounds = array<i64: 1, 32>}, {pipeline_mode = #tpu.pipeline_mode<synchronous>, transform_indices = @transform_6, window_bounds = array<i64: 1, 1>}, {transform_indices = @transform_7, window_bounds = array<i64: 1, 1, 8>}]} {
    %c0 = arith.constant 0 : index
    %c0_0 = arith.constant 0 : index
    %0 = vector.load %arg1[%c0, %c0_0] : memref<8x16xf32, #tpu.memory_space<vmem>>, vector<8x16xf32>
    %1 = arith.truncf %0 : vector<8x16xf32> to vector<8x16xbf16>
    %c0_1 = arith.constant 0 : index
    %c0_2 = arith.constant 0 : index
    %2 = vector.load %arg2[%c0_1, %c0_2] : memref<16x32xbf16, #tpu.memory_space<vmem>>, vector<16x32xbf16>
    %cst = arith.constant dense<0.000000e+00> : vector<8x32xf32>
    %3 = tpu.matmul %1, %2, %cst {dimension_numbers = #tpu.dot_dimension_numbers<[1], [0], [0], [1], [0, 0, 1, 1], [], []>} : vector<8x16xbf16>, vector<16x32xbf16>, vector<8x32xf32> -> vector<8x32xf32>
    %c0_3 = arith.constant 0 : index
    %c0_4 = arith.constant 0 : index
    %4 = vector.load %arg3[%c0_3, %c0_4] : memref<1x32xf32, #tpu.memory_space<vmem>>, vector<1x32xf32>
    %5 = vector.broadcast %4 : vector<1x32xf32> to vector<8x32xf32>
    %6 = arith.addf %3, %5 : vector<8x32xf32>
    %cst_5 = arith.constant 0.000000e+00 : f32
    %7 = vector.broadcast %cst_5 : f32 to vector<8x32xf32>
    %8 = arith.maximumf %6, %7 : vector<8x32xf32>
    %9 = arith.truncf %8 : vector<8x32xf32> to vector<8x32xbf16>
    %c0_6 = arith.constant 0 : index
    %c0_7 = arith.constant 0 : index
    %10 = vector.load %arg4[%c0_6, %c0_7] : memref<32x32xbf16, #tpu.memory_space<vmem>>, vector<32x32xbf16>
    %cst_8 = arith.constant dense<0.000000e+00> : vector<8x32xf32>
    %11 = tpu.matmul %9, %10, %cst_8 {dimension_numbers = #tpu.dot_dimension_numbers<[1], [0], [0], [1], [0, 0, 1, 1], [], []>} : vector<8x32xbf16>, vector<32x32xbf16>, vector<8x32xf32> -> vector<8x32xf32>
    %c0_9 = arith.constant 0 : index
    %c0_10 = arith.constant 0 : index
    %12 = vector.load %arg5[%c0_9, %c0_10] : memref<1x32xf32, #tpu.memory_space<vmem>>, vector<1x32xf32>
    %13 = vector.broadcast %12 : vector<1x32xf32> to vector<8x32xf32>
    %14 = arith.addf %11, %13 : vector<8x32xf32>
    %cst_11 = arith.constant 0.000000e+00 : f32
    %15 = vector.broadcast %cst_11 : f32 to vector<8x32xf32>
    %16 = arith.maximumf %14, %15 : vector<8x32xf32>
    %c0_12 = arith.constant 0 : index
    %c0_13 = arith.constant 0 : index
    %17 = vector.load %arg6[%c0_12, %c0_13] : memref<1x32xbf16, #tpu.memory_space<vmem>>, vector<1x32xbf16>
    %18 = arith.truncf %16 : vector<8x32xf32> to vector<8x32xbf16>
    %cst_14 = arith.constant dense<0.000000e+00> : vector<1x8xf32>
    %19 = tpu.matmul %17, %18, %cst_14 {dimension_numbers = #tpu.dot_dimension_numbers<[1], [1], [0], [0], [0, 0, 1, 0], [], []>} : vector<1x32xbf16>, vector<8x32xbf16>, vector<1x8xf32> -> vector<1x8xf32>
    %c0_15 = arith.constant 0 : index
    %c0_16 = arith.constant 0 : index
    %20 = vector.load %arg7[%c0_15, %c0_16] : memref<1x1xf32, #tpu.memory_space<vmem>>, vector<1x1xf32>
    %21 = vector.broadcast %20 : vector<1x1xf32> to vector<1x8xf32>
    %22 = arith.addf %19, %21 : vector<1x8xf32>
    %23 = vector.shape_cast %22 : vector<1x8xf32> to vector<1x1x8xf32>
    %c0_17 = arith.constant 0 : index
    %c0_18 = arith.constant 0 : index
    %c0_19 = arith.constant 0 : index
    %24 = vector.load %arg8[%c0_17, %c0_18, %c0_19] : memref<1x1x8xf32, #tpu.memory_space<vmem>>, vector<1x1x8xf32>
    tpu.vector_store %arg8[%c0_17, %c0_18, %c0_19], %23 {strides = array<i32>} : memref<1x1x8xf32, #tpu.memory_space<vmem>>, vector<1x1x8xf32>,
    return
  }
  func.func @transform_0(%arg0: i32) -> (i32, i32) {
    %c0_i32 = arith.constant 0 : i32
    %c0_i32_0 = arith.constant 0 : i32
    return %arg0, %c0_i32 : i32, i32
  }
  func.func @transform_1(%arg0: i32) -> (i32, i32) {
    %c0_i32 = arith.constant 0 : i32
    %c0_i32_0 = arith.constant 0 : i32
    %c0_i32_1 = arith.constant 0 : i32
    return %c0_i32, %c0_i32_0 : i32, i32
  }
  func.func @transform_2(%arg0: i32) -> (i32, i32) {
    %c0_i32 = arith.constant 0 : i32
    %c0_i32_0 = arith.constant 0 : i32
    %c0_i32_1 = arith.constant 0 : i32
    return %c0_i32, %c0_i32_0 : i32, i32
  }
  func.func @transform_3(%arg0: i32) -> (i32, i32) {
    %c0_i32 = arith.constant 0 : i32
    %c0_i32_0 = arith.constant 0 : i32
    %c0_i32_1 = arith.constant 0 : i32
    return %c0_i32, %c0_i32_0 : i32, i32
  }
  func.func @transform_4(%arg0: i32) -> (i32, i32) {
    %c0_i32 = arith.constant 0 : i32
    %c0_i32_0 = arith.constant 0 : i32
    %c0_i32_1 = arith.constant 0 : i32
    return %c0_i32, %c0_i32_0 : i32, i32
  }
  func.func @transform_5(%arg0: i32) -> (i32, i32) {
    %c0_i32 = arith.constant 0 : i32
    %c0_i32_0 = arith.constant 0 : i32
    %c0_i32_1 = arith.constant 0 : i32
    return %c0_i32, %c0_i32_0 : i32, i32
  }
  func.func @transform_6(%arg0: i32) -> (i32, i32) {
    %c0_i32 = arith.constant 0 : i32
    %c0_i32_0 = arith.constant 0 : i32
    %c0_i32_1 = arith.constant 0 : i32
    return %c0_i32, %c0_i32_0 : i32, i32
  }
  func.func @transform_7(%arg0: i32) -> (i32, i32, i32) {
    %c0_i32 = arith.constant 0 : i32
    %c0_i32_0 = arith.constant 0 : i32
    %c0_i32_1 = arith.constant 0 : i32
    return %arg0, %c0_i32, %c0_i32_0 : i32, i32, i32
  }
}

</mosaic_0001>

<llo_original>
// kernel: value_function_forward.1
$region0: #{value_function_forward.1}
  #allocation0 [shape = 'u32[]', space=smem, size = 0x4, offset = 0x4, fixed_abs, tag = 'smem constant byte address 0x4 - core index']
  #allocation1 [shape = 'u32[144,128]{1,0:T(1,128)}', space=vmem, size = 0x12000, scoped, tag = 'internal scratch']
  #allocation2 [shape = 'f32[1,1]{1,0:T(1,128)S(1)}', space=vmem, size = 0x200, scoped, tag = 'scoped memory for value_function_forward.1']
  %s0 = inlined_call_operand.hbm [shape: f32[8,16], index: 0, kind: input, shape index: {}]
  %s1 = inlined_call_operand.hbm [shape: bf16[16,32], index: 1, kind: input, shape index: {}]
  %s2 = inlined_call_operand.vmem [shape: f32[1,32], index: 2, kind: input, shape index: {}]
  %s3 = inlined_call_operand.vmem [shape: bf16[32,32], index: 3, kind: input, shape index: {}]
  %s4 = inlined_call_operand.vmem [shape: f32[1,32], index: 4, kind: input, shape index: {}]
  %s5 = inlined_call_operand.vmem [shape: bf16[1,32], index: 5, kind: input, shape index: {}]
  %s6 = inlined_call_operand.<no memory space> [shape: f32[1,1], index: 6, kind: input, shape index: {}]
  %s7 = inlined_call_operand.hbm [shape: f32[1,1,8], index: 7, kind: output, shape index: {}]
  %s8 = sld [smem:[#allocation0]]
  $region46: #{value_function_forward.1} parent=0
    _
  %s10 = ssub.s32 1, %s8
  %s11 = scalar_select 0, %s10, %s8
  %v12 = vstv %s6
  %13 = vst [vmem:[#allocation2] sm:$0x1] %v12
  $region1: #{value_function_forward.1} parent=0
    #allocation3 [shape = 'u8[4096]{0}', space=vmem, size = 0x1000, scoped, tag = 'input window, operand 0, single buffered']
    #allocation4 [shape = 's32[1]{0}', space=sflag, size = 0x4, scoped, tag = 'scoped memory for value_function_forward.1']
    #allocation5 [shape = 's32[1]{0}', space=sflag, size = 0x4, scoped, tag = 'scoped memory for value_function_forward.1']
    #allocation6 [shape = 'u8[4096]{0}', space=vmem, size = 0x1000, scoped, tag = 'input window, operand 1, single buffered']
    #allocation7 [shape = 's32[1]{0}', space=sflag, size = 0x4, scoped, tag = 'scoped memory for value_function_forward.1']
    #allocation8 [shape = 'u8[512]{0}', space=vmem, size = 0x400, scoped, tag = 'output window, operand 0, single buffered']
    %14 = vsyncpa [#allocation4], 0
    %15 = vsyncpa [#allocation7], 0
    %16 = vsyncpa [#allocation5], 0
    // Predicated region
    $region2: #{value_function_forward.1} parent=1 // pred_check
      _
    $region3: #{value_function_forward.1} parent=1 // pred_check_branch
      %18 = sbr.rel (0) target = $region5
    $region4: #{value_function_forward.1} parent=1 // pred_region
      %s20 = ssub.s32 128, 128
      %21 = vsyncadd [#allocation4], %s20
      %s23 = sshll.u32 [#allocation3], 4
      %s24 = int_to_ptr.vmem [resolvable:$true] %s23
      %26 = dma.hbm_to_vmem [thread:$0]  %s0, 128, %s24, [#allocation4]
    $region5: #{value_function_forward.1} parent=1 // pred_fallthru
      _
    // Predicated region
    $region6: #{value_function_forward.1} parent=1 // pred_check
      _
    $region7: #{value_function_forward.1} parent=1 // pred_check_branch
      %28 = sbr.rel (0) target = $region9
    $region8: #{value_function_forward.1} parent=1 // pred_region
      %s30 = ssub.s32 128, 128
      %31 = vsyncadd [#allocation7], %s30
      %s32 = sshll.u32 [#allocation6], 4
      %s33 = int_to_ptr.vmem [resolvable:$true] %s32
      %38 = dma.hbm_to_vmem [thread:$0]  %s1, 128, %s33, [#allocation7], 64, 64, 4
    $region9: #{value_function_forward.1} parent=1 // pred_fallthru
      _
    // Predicated region
    $region10: #{value_function_forward.1} parent=1 // pred_check
      _
    $region11: #{value_function_forward.1} parent=1 // pred_check_branch
      %40 = sbr.rel (0) target = $region13
    $region12: #{value_function_forward.1} parent=1 // pred_region
      _
    $region13: #{value_function_forward.1} parent=1 // pred_fallthru
      _
    // Predicated region
    $region14: #{value_function_forward.1} parent=1 // pred_check
      _
    $region15: #{value_function_forward.1} parent=1 // pred_check_branch
      %42 = sbr.rel (0) target = $region17
    $region16: #{value_function_forward.1} parent=1 // pred_region
      _
    $region17: #{value_function_forward.1} parent=1 // pred_fallthru
      _
    // Predicated region
    $region18: #{value_function_forward.1} parent=1 // pred_check
      _
    $region19: #{value_function_forward.1} parent=1 // pred_check_branch
      %44 = sbr.rel (0) target = $region21
    $region20: #{value_function_forward.1} parent=1 // pred_region
      _
    $region21: #{value_function_forward.1} parent=1 // pred_fallthru
      _
    // Predicated region
    $region22: #{value_function_forward.1} parent=1 // pred_check
      _
    $region23: #{value_function_forward.1} parent=1 // pred_check_branch
      %46 = sbr.rel (0) target = $region25
    $region24: #{value_function_forward.1} parent=1 // pred_region
      _
    $region25: #{value_function_forward.1} parent=1 // pred_fallthru
      _
    // Predicated region
    $region26: #{value_function_forward.1} parent=1 // pred_check
      _
    $region27: #{value_function_forward.1} parent=1 // pred_check_branch
      %48 = sbr.rel (0) target = $region29
    $region28: #{value_function_forward.1} parent=1 // pred_region
      _
    $region29: #{value_function_forward.1} parent=1 // pred_fallthru
      _
    // Predicated region
    $region30: #{value_function_forward.1} parent=1 // pred_check
      _
    $region31: #{value_function_forward.1} parent=1 // pred_check_branch
      %50 = sbr.rel (0) target = $region33
    $region32: #{value_function_forward.1} parent=1 // pred_region
      %51 = dma.done [#allocation4], 128
    $region33: #{value_function_forward.1} parent=1 // pred_fallthru
      _
    // Predicated region
    $region34: #{value_function_forward.1} parent=1 // pred_check
      _
    $region35: #{value_function_forward.1} parent=1 // pred_check_branch
      %53 = sbr.rel (0) target = $region37
    $region36: #{value_function_forward.1} parent=1 // pred_region
      %54 = dma.done [#allocation7], 128
    $region37: #{value_function_forward.1} parent=1 // pred_fallthru
      _
    %v56 = vld [vmem:[#allocation3] sm:$0xff]
    %v57 = vpack.c.bf16 %v56, %v56
    %v58 = vld [vmem:[#allocation6] sm:$0xf]
    %v59 = vld [vmem:[#allocation6 + $0x4] sm:$0xf]
    %v60 = vld [vmem:[%s2] sm:$0x1]
    %v62 = vlaneseq
    %v63 = vshrl.u32 %v62, 7
    %v64 = vsub.s32 0, %v63
    %v65 = vrot.slane %v60, %v64
    %v69 = vunpack.c.l.b16 %v58
    %v70 = vunpack.c.l.b16 %v59
    %v71 = vpack.c.b16 %v70, %v69
    %vm73 = vcmask 130048
    %v75 = vsel %vm73, %v57, 0
    %77 = vmatprep.subr.bf16.mxu0 0
    %78 = vmatpush1.bf16.msra.mxu0 %v71
    %79 = vmatprep.subr.bf16.mxu0 0
    %80 = vmatpush1.bf16.msra.mxu0 0
    %81 = vmatprep.subr.bf16.mxu0 0
    %82 = vmatpush1.bf16.msra.mxu0 0
    %83 = vmatprep.subr.bf16.mxu0 0
    %84 = vmatpush1.bf16.msra.mxu0 0
    %85 = vmatprep.subr.bf16.mxu0 0
    %86 = vmatpush1.bf16.msra.mxu0 0
    %87 = vmatprep.subr.bf16.mxu0 0
    %88 = vmatpush1.bf16.msra.mxu0 0
    %89 = vmatprep.subr.bf16.mxu0 0
    %90 = vmatpush1.bf16.msra.mxu0 0
    %91 = vmatprep.subr.bf16.mxu0 0
    %92 = vmatpush1.bf16.msra.mxu0 0
    %93 = vmatprep.subr.bf16.mxu0 0
    %94 = vmatpush1.bf16.msra.mxu0 0
    %95 = vmatprep.subr.bf16.mxu0 0
    %96 = vmatpush1.bf16.msra.mxu0 0
    %97 = vmatprep.subr.bf16.mxu0 0
    %98 = vmatpush1.bf16.msra.mxu0 0
    %99 = vmatprep.subr.bf16.mxu0 0
    %100 = vmatpush1.bf16.msra.mxu0 0
    %101 = vmatprep.subr.bf16.mxu0 0
    %102 = vmatpush1.bf16.msra.mxu0 0
    %103 = vmatprep.subr.bf16.mxu0 0
    %104 = vmatpush1.bf16.msra.mxu0 0
    %105 = vmatprep.subr.bf16.mxu0 0
    %106 = vmatpush1.bf16.msra.mxu0 0
    %107 = vmatprep.subr.bf16.mxu0 0
    %108 = vmatpush1.bf16.msra.mxu0 0
    %109 = vmatprep.mubr.bf16.mxu0 0
    %110 = vmatmul.mubr.bf16.gmra.mrb[0].mxu0 %v75
    %v111 = vpop.f32.mrb[0].mxu0
    %v112 = vadd.f32 %v65, %v111
    %v113 = vpop.f32.mrb[0].mxu0
    %v114 = vpop.f32.mrb[0].mxu0
    %v115 = vpop.f32.mrb[0].mxu0
    %116 = vdwg.mxu0
    %v117 = vmax.f32 %v112, 0.0
    %v118 = vpack.c.bf16 %v117, %v117
    %v119 = vld [vmem:[%s3] sm:$0xf]
    %v120 = vld [vmem:[%s3 + $0x4] sm:$0xf]
    %v121 = vld [vmem:[%s3 + $0x8] sm:$0xf]
    %v122 = vld [vmem:[%s3 + $0xc] sm:$0xf]
    %v123 = vld [vmem:[%s4] sm:$0x1]
    %v125 = vlaneseq
    %v126 = vshrl.u32 %v125, 7
    %v127 = vsub.s32 0, %v126
    %v128 = vrot.slane %v123, %v127
    %v134 = vunpack.c.l.b16 %v119
    %v135 = vunpack.c.l.b16 %v120
    %v136 = vunpack.c.l.b16 %v121
    %v137 = vunpack.c.l.b16 %v122
    %v138 = vpack.c.b16 %v135, %v134
    %v139 = vpack.c.b16 %v137, %v136
    %vm142 = vcmask 261120
    %v144 = vsel %vm142, %v118, 0
    %146 = vmatprep.subr.bf16.mxu0 0
    %147 = vmatpush1.bf16.msra.mxu0 %v138
    %148 = vmatprep.subr.bf16.mxu0 0
    %149 = vmatpush1.bf16.msra.mxu0 %v139
    %150 = vmatprep.subr.bf16.mxu0 0
    %151 = vmatpush1.bf16.msra.mxu0 0
    %152 = vmatprep.subr.bf16.mxu0 0
    %153 = vmatpush1.bf16.msra.mxu0 0
    %154 = vmatprep.subr.bf16.mxu0 0
    %155 = vmatpush1.bf16.msra.mxu0 0
    %156 = vmatprep.subr.bf16.mxu0 0
    %157 = vmatpush1.bf16.msra.mxu0 0
    %158 = vmatprep.subr.bf16.mxu0 0
    %159 = vmatpush1.bf16.msra.mxu0 0
    %160 = vmatprep.subr.bf16.mxu0 0
    %161 = vmatpush1.bf16.msra.mxu0 0
    %162 = vmatprep.subr.bf16.mxu0 0
    %163 = vmatpush1.bf16.msra.mxu0 0
    %164 = vmatprep.subr.bf16.mxu0 0
    %165 = vmatpush1.bf16.msra.mxu0 0
    %166 = vmatprep.subr.bf16.mxu0 0
    %167 = vmatpush1.bf16.msra.mxu0 0
    %168 = vmatprep.subr.bf16.mxu0 0
    %169 = vmatpush1.bf16.msra.mxu0 0
    %170 = vmatprep.subr.bf16.mxu0 0
    %171 = vmatpush1.bf16.msra.mxu0 0
    %172 = vmatprep.subr.bf16.mxu0 0
    %173 = vmatpush1.bf16.msra.mxu0 0
    %174 = vmatprep.subr.bf16.mxu0 0
    %175 = vmatpush1.bf16.msra.mxu0 0
    %176 = vmatprep.subr.bf16.mxu0 0
    %177 = vmatpush1.bf16.msra.mxu0 0
    %178 = vmatprep.mubr.bf16.mxu0 0
    %179 = vmatmul.mubr.bf16.gmra.mrb[0].mxu0 %v144
    %v180 = vpop.f32.mrb[0].mxu0
    %v181 = vadd.f32 %v128, %v180
    %v182 = vpop.f32.mrb[0].mxu0
    %v183 = vpop.f32.mrb[0].mxu0
    %v184 = vpop.f32.mrb[0].mxu0
    %185 = vdwg.mxu0
    %v186 = vmax.f32 %v181, 0.0
    %v187 = vld [vmem:[%s5] sm:$0x1]
    %v188 = vpack.c.bf16 %v186, %v186
    %v189 = vld [vmem:[#allocation2] sm:$0x1]
    %191 = vset.pattern.permute.xlu0 0
    %192 = vperm.xlu0 %191, %v189
    %v193 = vpop.permute.xlu0 %192
    %v195 = vlaneseq
    %v196 = vshrl.u32 %v195, 7
    %v197 = vsub.s32 0, %v196
    %v198 = vrot.slane %v193, %v197
    %v200 = vsel %vm142, %v187, 0
    %v203 = vsel %vm142, %v188, 0
    %205 = vmatprep.subr.bf16.mxu0 0
    %206 = vmatpush1.bf16.xpose.msra.mxu0 %v203
    %207 = vmatprep.subr.bf16.mxu0 0
    %208 = vmatpush1.bf16.xpose.msra.mxu0 0
    %209 = vmatprep.subr.bf16.mxu0 0
    %210 = vmatpush1.bf16.xpose.msra.mxu0 0
    %211 = vmatprep.subr.bf16.mxu0 0
    %212 = vmatpush1.bf16.xpose.msra.mxu0 0
    %213 = vmatprep.subr.bf16.mxu0 0
    %214 = vmatpush1.bf16.xpose.msra.mxu0 0
    %215 = vmatprep.subr.bf16.mxu0 0
    %216 = vmatpush1.bf16.xpose.msra.mxu0 0
    %217 = vmatprep.subr.bf16.mxu0 0
    %218 = vmatpush1.bf16.xpose.msra.mxu0 0
    %219 = vmatprep.subr.bf16.mxu0 0
    %220 = vmatpush1.bf16.xpose.msra.mxu0 0
    %221 = vmatprep.subr.bf16.mxu0 0
    %222 = vmatpush1.bf16.xpose.msra.mxu0 0
    %223 = vmatprep.subr.bf16.mxu0 0
    %224 = vmatpush1.bf16.xpose.msra.mxu0 0
    %225 = vmatprep.subr.bf16.mxu0 0
    %226 = vmatpush1.bf16.xpose.msra.mxu0 0
    %227 = vmatprep.subr.bf16.mxu0 0
    %228 = vmatpush1.bf16.xpose.msra.mxu0 0
    %229 = vmatprep.subr.bf16.mxu0 0
    %230 = vmatpush1.bf16.xpose.msra.mxu0 0
    %231 = vmatprep.subr.bf16.mxu0 0
    %232 = vmatpush1.bf16.xpose.msra.mxu0 0
    %233 = vmatprep.subr.bf16.mxu0 0
    %234 = vmatpush1.bf16.xpose.msra.mxu0 0
    %235 = vmatprep.subr.bf16.mxu0 0
    %236 = vmatpush1.bf16.xpose.msra.mxu0 0
    %237 = vmatprep.mubr.bf16.mxu0 0
    %238 = vmatmul.mubr.bf16.gmra.mrb[0].mxu0 %v200
    %v239 = vpop.f32.mrb[0].mxu0
    %v240 = vadd.f32 %v198, %v239
    %v241 = vpop.f32.mrb[0].mxu0
    %v242 = vpop.f32.mrb[0].mxu0
    %v243 = vpop.f32.mrb[0].mxu0
    %244 = vdwg.mxu0
    %vm245 = vcmask 57344
    %246 = vst.msk [vmem:[#allocation8] sm:$0x1] %vm245, %v240
    // Predicated region
    $region38: #{value_function_forward.1} parent=1 // pred_check
      _
    $region39: #{value_function_forward.1} parent=1 // pred_check_branch
      %248 = sbr.rel (0) target = $region41
    $region40: #{value_function_forward.1} parent=1 // pred_region
      %s250 = ssub.s32 16, 16
      %251 = vsyncadd [#allocation5], %s250
      %s253 = sshll.u32 [#allocation8], 4
      %s254 = int_to_ptr.vmem [resolvable:$true] %s253
      %256 = dma.vmem_to_hbm [thread:$0]  %s254, 16, %s7, [#allocation5]
    $region41: #{value_function_forward.1} parent=1 // pred_fallthru
      _
    // Predicated region
    $region42: #{value_function_forward.1} parent=1 // pred_check
      _
    $region43: #{value_function_forward.1} parent=1 // pred_check_branch
      %258 = sbr.rel (0) target = $region45
    $region44: #{value_function_forward.1} parent=1 // pred_region
      %259 = dma.done [#allocation5], 16
    $region45: #{value_function_forward.1} parent=1 // pred_fallthru
      _
    %260 = vsyncpa [#allocation4], 1
    %261 = vsyncpa [#allocation7], 1
    %262 = vsyncpa [#allocation5], 1

</llo_original>
